<compile_context>
chip_gen: v6e
topology: v6e:2x2x1
jax: 0.10.0
libtpu: 0.0.40
codegen_flags: <defaults>
</compile_context>

<pallas_src>
import math

import jax
import jax.numpy as jnp
from jax.experimental import pallas as pl
from jax.experimental.pallas import tpu as pltpu


def _halting_kernel(x_ref, gw_ref, c_ref, o_ref):
    """sigmoid(LayerNorm(x) @ w + b) for one tile of rows.

    x_ref : (tm, D)  activations (any float dtype, promoted to f32 in-register)
    gw_ref: (8, D)   f32, gamma * w replicated over 8 sublanes (MXU-aligned)
    c_ref : (1, 1)   f32 scalar in SMEM, beta @ w + b
    o_ref : (1, tm)  f32, lane-dense halting probabilities for this tile
    """
    x = x_ref[...].astype(jnp.float32)

    # LayerNorm statistics (biased variance, eps=1e-5: matches torch.nn.LayerNorm).
    mean = jnp.mean(x, axis=-1, keepdims=True)
    centered = x - mean
    var = jnp.mean(centered * centered, axis=-1, keepdims=True)
    xn = centered * jax.lax.rsqrt(var + 1e-5)                 # (tm, D)

    # logit_i = sum_d xn[i,d] * (gamma*w)[d] + (beta@w + b).
    # Contract over D against the folded gw rows so the result lands lane-dense
    # as (8, tm); all 8 rows are identical, keep row 0.
    logits = jnp.einsum("od,td->ot", gw_ref[...], xn,
                        preferred_element_type=jnp.float32)    # (8, tm)
    o_ref[...] = jax.nn.sigmoid(logits[0:1, :] + c_ref[0, 0])


def _round_up(v, m):
    return -(-v // m) * m


def _round_down(v, m):
    return (v // m) * m


def _vmem_capacity_bytes():
    """Physical VMEM of the local part; conservative (v7x-sized) fallback."""
    try:
        return int(pltpu.get_tpu_info().vmem_capacity_bytes)
    except Exception:
        return 64 * 1024 * 1024


def _pick_tile_rows(n_rows, dim, itemsize, vmem_cap_bytes):
    """Pick the row-tile size by bytes, not a fixed row count.

    Per-row live VMEM:
      2 x input row (double-buffered input tile, producer dtype)
    + ~4 x f32 rows (x cast, centered, xn, plus a possible matmul-operand
      relayout) -- the intermediates that actually bound tm on 64-MiB VMEM
      parts and for bf16 inputs.
    """
    per_row = 2 * dim * itemsize + 4 * dim * 4
    if vmem_cap_bytes >= 96 * 1024 * 1024:
        budget = 56 * 1024 * 1024      # 128-MiB VMEM parts (v5e / v6e)
    else:
        budget = 40 * 1024 * 1024      # 64-MiB VMEM parts (v7x), leave headroom
    tm = max(8, budget // per_row)

    # Never tile far past the real row count.
    if n_rows >= 128:
        tm = min(tm, _round_up(n_rows, 128))
    else:
        tm = min(tm, _round_up(n_rows, 8))

    # Keep >= min_blocks grid steps when there is enough work, so
    # dimension_semantics=("parallel",) feeds both v7x TensorCores and each TC
    # gets >=2 steps of DMA/compute overlap.  Harmless on 1-TC parts.
    if n_rows >= 2048:
        min_blocks = 4
    elif n_rows >= 256:
        min_blocks = 2
    else:
        min_blocks = 1
    if -(-n_rows // tm) < min_blocks:
        tm = -(-n_rows // min_blocks)

    # Lane-align the output tile -> dense 128-wide stores.
    if tm >= 128:
        tm = _round_down(tm, 128)
    else:
        tm = max(8, _round_up(tm, 8))
    return int(tm)


@jax.jit
def halting_unit(x, gamma, beta, w, b):
    """HaltingUnit forward: sigmoid(Linear(LayerNorm(x))).

    x     : (batch, seq, dim_model)  keep in the producer's dtype (bf16 is fine:
            the kernel promotes in-register; do NOT pre-cast to f32 at call
            sites -- that doubles HBM traffic of a bandwidth-bound kernel).
    gamma : (dim_model,)      LayerNorm weight
    beta  : (dim_model,)      LayerNorm bias
    w     : (1, dim_model) / (dim_model,) / (dim_model, 1)  Linear weight
    b     : (1,) or scalar    Linear bias (halting_bias_init)
    returns (batch, seq, 1) float32 halting probabilities.
    """
    batch, seq, dim = x.shape
    n = batch * seq

    # Fold LayerNorm affine + Linear into gw (per-feature) and c (scalar).
    wv = w.reshape(-1).astype(jnp.float32)                     # (D,)
    gw = gamma.reshape(-1).astype(jnp.float32) * wv            # (D,)
    gw8 = jnp.tile(gw[None, :], (8, 1))                        # (8, D) sublane-aligned
    c = (jnp.dot(beta.reshape(-1).astype(jnp.float32), wv)
         + jnp.asarray(b, jnp.float32).reshape(-1)[0]).reshape(1, 1)

    itemsize = x.dtype.itemsize
    vmem_cap = _vmem_capacity_bytes()
    tm = _pick_tile_rows(n, dim, itemsize, vmem_cap)
    num_blocks = -(-n // tm)
    n_pad = num_blocks * tm

    # No input padding: the last (possibly partial) row block is handled by
    # Pallas; its garbage rows land only in out[0, n:n_pad], which is sliced
    # off below.  Only the tiny (1, n_pad) output is padded.
    x2 = x.reshape(n, dim)

    # Explicit VMEM budget: double-buffered input tiles + f32 intermediates
    # (incl. a possible matmul-operand relayout) + params + output + headroom.
    vmem_needed = (2 * tm * dim * itemsize        # double-buffered input tiles
                   + 4 * tm * dim * 4             # f32 LN / matmul intermediates
                   + 2 * 8 * dim * 4              # folded gamma*w (double-buffered)
                   + 2 * tm * 4                   # output tiles
                   + (2 << 20))                   # Mosaic internal scratch headroom
    if vmem_cap >= 96 * 1024 * 1024:
        vmem_limit = min(max(vmem_needed, 32 * 1024 * 1024), 80 * 1024 * 1024)
    else:
        vmem_limit = min(max(vmem_needed, 32 * 1024 * 1024), 56 * 1024 * 1024)

    out = pl.pallas_call(
        _halting_kernel,
        out_shape=jax.ShapeDtypeStruct((1, n_pad), jnp.float32),
        grid_spec=pltpu.PrefetchScalarGridSpec(
            num_scalar_prefetch=0,
            grid=(num_blocks,),
            in_specs=[
                pl.BlockSpec((tm, dim), lambda i: (i, 0)),          # x rows, full D resident
                pl.BlockSpec((8, dim), lambda i: (0, 0)),           # folded gamma*w (stays resident)
                pl.BlockSpec(memory_space=pltpu.MemorySpace.SMEM),  # scalar c = beta@w + b
            ],
            out_specs=pl.BlockSpec((1, tm), lambda i: (0, i)),      # lane-dense output slab
        ),
        compiler_params=pltpu.CompilerParams(
            dimension_semantics=("parallel",),   # row tiles shard across v7x's 2 TCs
            vmem_limit_bytes=int(vmem_limit),
        ),
    )(x2, gw8, c)

    return out[0, :n].reshape(batch, seq, 1)


def reference(x, gamma, beta, w, b):
    xf = x.astype(jnp.float32)
    mean = jnp.mean(xf, axis=-1, keepdims=True)
    var = jnp.mean((xf - mean) ** 2, axis=-1, keepdims=True)
    xn = (xf - mean) * jax.lax.rsqrt(var + 1e-5)
    y = xn * gamma.reshape(-1) + beta.reshape(-1)
    logit = y @ w.reshape(-1, 1) + jnp.asarray(b, jnp.float32).reshape(-1)[0]
    return jax.nn.sigmoid(logit)


if __name__ == "__main__":
    dim_model = 32
    key = jax.random.PRNGKey(0)
    kx, kw, kx2 = jax.random.split(key, 3)

    # Parameter init mirroring HaltingUnit.__init__:
    #   LayerNorm: weight=1, bias=0
    #   Linear(dim_model, 1): uniform weight, bias = halting_bias_init = 1.0
    gamma = jnp.ones((dim_model,), dtype=jnp.float32)
    beta = jnp.zeros((dim_model,), dtype=jnp.float32)
    bound = 1.0 / math.sqrt(dim_model)
    w = jax.random.uniform(kw, (1, dim_model), dtype=jnp.float32,
                           minval=-bound, maxval=bound)   # torch Linear weight layout (out,in)
    b = jnp.full((1,), 1.0, dtype=jnp.float32)            # halting_bias_init

    # Main test: batch=2, seq=8.
    x = jax.random.normal(kx, (2, 8, dim_model), dtype=jnp.float32)
    out = halting_unit(x, gamma, beta, w, b)
    out = jax.block_until_ready(out)
    ref = reference(x, gamma, beta, w, b)
    assert out.shape == (2, 8, 1), out.shape
    assert jnp.allclose(out, ref, atol=1e-5, rtol=1e-5), (
        float(jnp.max(jnp.abs(out - ref))))

    # Ragged test: batch*seq not a multiple of the row tile -> exercises the
    # no-pad / partial-last-block path; garbage tail lanes must be sliced off.
    x_r = jax.random.normal(kx2, (3, 5, dim_model), dtype=jnp.float32)
    out_r = halting_unit(x_r, gamma, beta, w, b)
    out_r = jax.block_until_ready(out_r)
    ref_r = reference(x_r, gamma, beta, w, b)
    assert out_r.shape == (3, 5, 1), out_r.shape
    assert jnp.allclose(out_r, ref_r, atol=1e-5, rtol=1e-5), (
        float(jnp.max(jnp.abs(out_r - ref_r))))

    print("KERNEL_OK")
</pallas_src>

<mosaic_0001>
module attributes {stable_mosaic.version = 11 : i64} {
  func.func @_halting_kernel(%arg0: i32, %arg1: memref<16x32xf32, #tpu.memory_space<vmem>>, %arg2: memref<8x32xf32, #tpu.memory_space<vmem>>, %arg3: memref<1x1xf32, #tpu.memory_space<smem>>, %arg4: memref<1x16xf32, #tpu.memory_space<vmem>>) attributes {dimension_semantics = [#tpu.dimension_semantics<parallel>], iteration_bounds = array<i64: 1>, scalar_prefetch = 0 : i64, scratch_operands = 0 : i64, tpu.core_type = #tpu.core_type<tc>, window_params = [{transform_indices = @transform_0, window_bounds = array<i64: 16, 32>}, {pipeline_mode = #tpu.pipeline_mode<synchronous>, transform_indices = @transform_1, window_bounds = array<i64: 8, 32>}, {transform_indices = @transform_2, window_bounds = array<i64: 1, 1>}, {transform_indices = @transform_3, window_bounds = array<i64: 1, 16>}]} {
    %c0 = arith.constant 0 : index
    %c0_0 = arith.constant 0 : index
    %0 = vector.load %arg1[%c0, %c0_0] : memref<16x32xf32, #tpu.memory_space<vmem>>, vector<16x32xf32>
    %cst = arith.constant dense<0.000000e+00> : vector<16xf32>
    %1 = vector.multi_reduction <add>, %0, %cst [1] : vector<16x32xf32> to vector<16xf32>
    %2 = vector.shape_cast %1 : vector<16xf32> to vector<16x1xf32>
    %cst_1 = arith.constant 3.200000e+01 : f32
    %3 = vector.broadcast %cst_1 : f32 to vector<16x1xf32>
    %4 = arith.divf %2, %3 : vector<16x1xf32>
    %5 = vector.broadcast %4 : vector<16x1xf32> to vector<16x32xf32>
    %6 = arith.subf %0, %5 : vector<16x32xf32>
    %7 = arith.mulf %6, %6 : vector<16x32xf32>
    %cst_2 = arith.constant dense<0.000000e+00> : vector<16xf32>
    %8 = vector.multi_reduction <add>, %7, %cst_2 [1] : vector<16x32xf32> to vector<16xf32>
    %9 = vector.shape_cast %8 : vector<16xf32> to vector<16x1xf32>
    %cst_3 = arith.constant 3.200000e+01 : f32
    %10 = vector.broadcast %cst_3 : f32 to vector<16x1xf32>
    %11 = arith.divf %9, %10 : vector<16x1xf32>
    %cst_4 = arith.constant 9.99999974E-6 : f32
    %12 = vector.broadcast %cst_4 : f32 to vector<16x1xf32>
    %13 = arith.addf %11, %12 : vector<16x1xf32>
    %14 = math.rsqrt %13 : vector<16x1xf32>
    %15 = vector.broadcast %14 : vector<16x1xf32> to vector<16x32xf32>
    %16 = arith.mulf %6, %15 : vector<16x32xf32>
    %c0_5 = arith.constant 0 : index
    %c0_6 = arith.constant 0 : index
    %17 = vector.load %arg2[%c0_5, %c0_6] : memref<8x32xf32, #tpu.memory_space<vmem>>, vector<8x32xf32>
    "tpu.trace_start"() <{level = 10 : i32, message = "od,td->ot"}> : () -> ()
    %cst_7 = arith.constant dense<0.000000e+00> : vector<8x16xf32>
    %18 = tpu.matmul %17, %16, %cst_7 {dimension_numbers = #tpu.dot_dimension_numbers<[1], [1], [0], [0], [0, 0, 1, 0], [], []>} : vector<8x32xf32>, vector<16x32xf32>, vector<8x16xf32> -> vector<8x16xf32>
    "tpu.trace_stop"() : () -> ()
    %19 = vector.extract_strided_slice %18 {offsets = [0, 0], sizes = [1, 16], strides = [1, 1]} : vector<8x16xf32> to vector<1x16xf32>
    %c0_8 = arith.constant 0 : index
    %c0_9 = arith.constant 0 : index
    %20 = memref.load %arg3[%c0_8, %c0_9] : memref<1x1xf32, #tpu.memory_space<smem>>
    %21 = vector.broadcast %20 : f32 to vector<1x16xf32>
    %22 = arith.addf %19, %21 : vector<1x16xf32>
    %23 = arith.negf %22 : vector<1x16xf32>
    %24 = math.exp %23 : vector<1x16xf32>
    %cst_10 = arith.constant 1.000000e+00 : f32
    %25 = vector.broadcast %cst_10 : f32 to vector<1x16xf32>
    %26 = arith.addf %25, %24 : vector<1x16xf32>
    %27 = arith.divf %25, %26 : vector<1x16xf32>
    %c0_11 = arith.constant 0 : index
    %c0_12 = arith.constant 0 : index
    %28 = vector.load %arg4[%c0_11, %c0_12] : memref<1x16xf32, #tpu.memory_space<vmem>>, vector<1x16xf32>
    tpu.vector_store %arg4[%c0_11, %c0_12], %27 {strides = array<i32>} : memref<1x16xf32, #tpu.memory_space<vmem>>, vector<1x16xf32>,
    return
  }
  func.func @transform_0(%arg0: i32) -> (i32, i32) {
    %c0_i32 = arith.constant 0 : i32
    %c0_i32_0 = arith.constant 0 : i32
    return %arg0, %c0_i32 : i32, i32
  }
  func.func @transform_1(%arg0: i32) -> (i32, i32) {
    %c0_i32 = arith.constant 0 : i32
    %c0_i32_0 = arith.constant 0 : i32
    %c0_i32_1 = arith.constant 0 : i32
    return %c0_i32, %c0_i32_0 : i32, i32
  }
  func.func @transform_2(%arg0: i32) -> (i32, i32) {
    %c0_i32 = arith.constant 0 : i32
    %c0_i32_0 = arith.constant 0 : i32
    %c0_i32_1 = arith.constant 0 : i32
    return %c0_i32, %c0_i32_0 : i32, i32
  }
  func.func @transform_3(%arg0: i32) -> (i32, i32) {
    %c0_i32 = arith.constant 0 : i32
    %c0_i32_0 = arith.constant 0 : i32
    return %c0_i32, %arg0 : i32, i32
  }
}

</mosaic_0001>

<llo_original>
// kernel: squeeze.3
$region0: #{squeeze.3}
  %s0 = inlined_call_operand.vmem [shape: f32[16], index: 0, kind: input, shape index: {}]
  %s1 = inlined_call_operand.hbm [shape: f32[2,8,1], index: 1, kind: output, shape index: {}]
  $region1: #{squeeze.3} parent=0
    #allocation0 [shape = 'u8[1024]{0}', space=vmem, size = 0x400, scoped, tag = 'operand span for operand 1']
    #allocation1 [shape = 's32[1]{0}', space=sflag, size = 0x4, scoped, tag = 'scoped memory for squeeze.3']
    #allocation2 [shape = 'u8[4096]{0}', space=vmem, size = 0x1000, scoped, tag = 'scoped mem for output reshape']
    #allocation3 [shape = 'u8[4096]{0}', space=vmem, size = 0x1000, scoped, tag = 'scoped mem for input reshape']
    %2 = vsyncpa [#allocation1], 0
    %s4 = sshll.u32 1, 1
    %s5 = ssub.s32 %s4, 1
    %v6 = vld [vmem:[%s0] sm:%s5]
    %7 = vst [vmem:[#allocation3] sm:%s5] %v6
    %v8 = vld [vmem:[#allocation3] sm:$0x1]
    %vm9 = vcmask 64512
    %10 = vst.msk [vmem:[#allocation2] sm:$0x1] %vm9, %v8
    %v11 = vld [vmem:[#allocation3] sm:$0x1]
    %12 = vrot.lane.b32.xlu0 %v11, 120
    %v13 = vpop.permute.xlu0 %12
    %vm14 = vcmask 64512
    %s15 = scalar_lea.vmem [#allocation2], 1
    %16 = vst.msk [vmem:[%s15] sm:$0x1] %vm14, %v13
    %s18 = sshll.u32 1, 2
    %s19 = ssub.s32 %s18, 1
    %v21 = vld [vmem:[#allocation2] sm:%s19]
    %s22 = sshll.u32 1, 2
    %s23 = ssub.s32 %s22, 1
    %24 = vst [vmem:[#allocation0] sm:%s23] %v21
    %s26 = ssub.s32 32, 32
    %27 = vsyncadd [#allocation1], %s26
    %s29 = sshll.u32 [#allocation0], 4
    %s30 = int_to_ptr.vmem [resolvable:$true] %s29
    %32 = dma.vmem_to_hbm [thread:$0]  %s30, 32, %s1, [#allocation1]
    %33 = dma.done [#allocation1], 32
    %34 = vsyncpa [#allocation1], 1

// kernel: halting_unit.1
$region0: #{halting_unit.1}
  #allocation0 [shape = 'u32[]', space=smem, size = 0x4, offset = 0x4, fixed_abs, tag = 'smem constant byte address 0x4 - core index']
  #allocation1 [shape = 'u32[144,128]{1,0:T(1,128)}', space=vmem, size = 0x12000, scoped, tag = 'internal scratch']
  #allocation2 [shape = 'f32[1,1]{1,0:T(1,128)S(6)}', space=smem, size = 0x200, scoped, tag = 'scoped memory for halting_unit.1']
  %s0 = inlined_call_operand.vmem [shape: f32[16,32], index: 0, kind: input, shape index: {}]
  %s1 = inlined_call_operand.vmem [shape: f32[8,32], index: 1, kind: input, shape index: {}]
  %s2 = inlined_call_operand.<no memory space> [shape: f32[1,1], index: 2, kind: input, shape index: {}]
  %s3 = inlined_call_operand.vmem [shape: f32[1,16], index: 3, kind: output, shape index: {}]
  %s4 = sld [smem:[#allocation0]]
  $region22: #{halting_unit.1} parent=0
    _
  %s6 = ssub.s32 1, %s4
  %s7 = scalar_select 0, %s6, %s4
  %8 = sst [smem:[#allocation2]] %s2
  // Predicated region
  $region2: #{halting_unit.1} parent=0 // pred_check
    _
  $region3: #{halting_unit.1} parent=0 // pred_check_branch
    %10 = sbr.rel (0) target = $region5
  $region4: #{halting_unit.1} parent=0 // pred_region
    _
  $region5: #{halting_unit.1} parent=0 // pred_fallthru
    _
  // Predicated region
  $region6: #{halting_unit.1} parent=0 // pred_check
    _
  $region7: #{halting_unit.1} parent=0 // pred_check_branch
    %12 = sbr.rel (0) target = $region9
  $region8: #{halting_unit.1} parent=0 // pred_region
    _
  $region9: #{halting_unit.1} parent=0 // pred_fallthru
    _
  // Predicated region
  $region10: #{halting_unit.1} parent=0 // pred_check
    _
  $region11: #{halting_unit.1} parent=0 // pred_check_branch
    %14 = sbr.rel (0) target = $region13
  $region12: #{halting_unit.1} parent=0 // pred_region
    _
  $region13: #{halting_unit.1} parent=0 // pred_fallthru
    _
  %v15 = vld [vmem:[%s0] sm:$0xff]
  %v16 = vld [vmem:[%s0 + $0x8] sm:$0xff]
  %vm17 = vcmask 261120
  %v18 = vsel %vm17, %v15, 0.0
  %19 = vadd.xlane.f32.xlu0 %v18
  %v20 = vpop.xlane.xlu0 %19
  %v21 = vsel %vm17, %v16, 0.0
  %22 = vadd.xlane.f32.xlu0 %v21
  %v23 = vpop.xlane.xlu0 %22
  %v24 = vrcp.pop 32.0
  %v25 = vmul.f32 %v20, %v24
  %v26 = vmul.f32 %v23, %v24
  %v27 = vsub.f32 %v15, %v25
  %v28 = vsub.f32 %v16, %v26
  %v29 = vmul.f32 %v27, %v27
  %v30 = vmul.f32 %v28, %v28
  %v31 = vsel %vm17, %v29, 0.0
  %32 = vadd.xlane.f32.xlu0 %v31
  %v33 = vpop.xlane.xlu0 %32
  %v34 = vsel %vm17, %v30, 0.0
  %35 = vadd.xlane.f32.xlu0 %v34
  %v36 = vpop.xlane.xlu0 %35
  %v37 = vmul.f32 %v33, %v24
  %v38 = vmul.f32 %v36, %v24
  %v39 = vadd.f32 %v37, 1e-05
  %v40 = vadd.f32 %v38, 1e-05
  %v41 = vrsqrt.pop %v39
  %v42 = vrsqrt.pop %v40
  %v43 = vmul.f32 %v27, %v41
  %v44 = vmul.f32 %v28, %v42
  %v45 = vld [vmem:[%s1] sm:$0xff]
  %v47 = vsel %vm17, %v45, 0
  %v50 = vsel %vm17, %v43, 0
  %v53 = vsel %vm17, %v44, 0
  %55 = vmatprep.subr.mxu0 0.0
  %56 = vmatpush1.xpose.msra.mxu0 0.0
  %57 = vmatprep.subr.mxu0 0.0
  %58 = vmatpush1.xpose.msra.mxu0 0.0
  %59 = vmatprep.subr.mxu0 0.0
  %60 = vmatpush1.xpose.msra.mxu0 0.0
  %61 = vmatprep.subr.mxu0 0.0
  %62 = vmatpush1.xpose.msra.mxu0 0.0
  %63 = vmatprep.subr.mxu0 0.0
  %64 = vmatpush1.xpose.msra.mxu0 0.0
  %65 = vmatprep.subr.mxu0 0.0
  %66 = vmatpush1.xpose.msra.mxu0 0.0
  %67 = vmatprep.subr.mxu0 0.0
  %68 = vmatpush1.xpose.msra.mxu0 0.0
  %69 = vmatprep.subr.mxu0 0.0
  %70 = vmatpush1.xpose.msra.mxu0 0.0
  %71 = vmatprep.subr.mxu0 0.0
  %72 = vmatpush1.xpose.msra.mxu0 0.0
  %73 = vmatprep.subr.mxu0 0.0
  %74 = vmatpush1.xpose.msra.mxu0 0.0
  %75 = vmatprep.subr.mxu0 0.0
  %76 = vmatpush1.xpose.msra.mxu0 0.0
  %77 = vmatprep.subr.mxu0 0.0
  %78 = vmatpush1.xpose.msra.mxu0 0.0
  %79 = vmatprep.subr.mxu0 0.0
  %80 = vmatpush1.xpose.msra.mxu0 0.0
  %81 = vmatprep.subr.mxu0 0.0
  %82 = vmatpush1.xpose.msra.mxu0 0.0
  %83 = vmatprep.subr.mxu0 0.0
  %84 = vmatpush1.xpose.msra.mxu0 %v53
  %85 = vmatprep.subr.mxu0 0.0
  %86 = vmatpush1.xpose.msra.mxu0 %v50
  %87 = vmatprep.subr.mxu0 0.0
  %88 = vmatpush2.xpose.msra.mxu0 0.0
  %89 = vmatprep.subr.mxu0 0.0
  %90 = vmatpush2.xpose.msra.mxu0 0.0
  %91 = vmatprep.subr.mxu0 0.0
  %92 = vmatpush2.xpose.msra.mxu0 0.0
  %93 = vmatprep.subr.mxu0 0.0
  %94 = vmatpush2.xpose.msra.mxu0 0.0
  %95 = vmatprep.subr.mxu0 0.0
  %96 = vmatpush2.xpose.msra.mxu0 0.0
  %97 = vmatprep.subr.mxu0 0.0
  %98 = vmatpush2.xpose.msra.mxu0 0.0
  %99 = vmatprep.subr.mxu0 0.0
  %100 = vmatpush2.xpose.msra.mxu0 0.0
  %101 = vmatprep.subr.mxu0 0.0
  %102 = vmatpush2.xpose.msra.mxu0 0.0
  %103 = vmatprep.subr.mxu0 0.0
  %104 = vmatpush2.xpose.msra.mxu0 0.0
  %105 = vmatprep.subr.mxu0 0.0
  %106 = vmatpush2.xpose.msra.mxu0 0.0
  %107 = vmatprep.subr.mxu0 0.0
  %108 = vmatpush2.xpose.msra.mxu0 0.0
  %109 = vmatprep.subr.mxu0 0.0
  %110 = vmatpush2.xpose.msra.mxu0 0.0
  %111 = vmatprep.subr.mxu0 0.0
  %112 = vmatpush2.xpose.msra.mxu0 0.0
  %113 = vmatprep.subr.mxu0 0.0
  %114 = vmatpush2.xpose.msra.mxu0 0.0
  %115 = vmatprep.subr.mxu0 0.0
  %116 = vmatpush2.xpose.msra.mxu0 0.0
  %117 = vmatprep.subr.mxu0 0.0
  %118 = vmatpush2.xpose.msra.mxu0 0.0
  %119 = vmatprep.mubr.f32.mxu0 0.0
  %120 = vmatmul.mubr.f32.gmra.mxu0 %v47
  %v121 = vpop.f32.mrf.mxu0
  %v122 = vadd.f32 0.0, %v121
  %v123 = vpop.f32.mrf.mxu0
  %124 = vdwg.mxu0
  %s125 = sld [smem:[#allocation2]]
  %v126 = vstv %s125
  %v127 = vadd.f32 %v122, %v126
  %v128 = vxor.u32 %v127, 2147483648
  %v129 = vmul.f32 %v128, 1.442695
  %v130 = vpow.pop %v129
  %v131 = vadd.f32 %v130, 1.0
  %v132 = vrcp.pop %v131
  %v133 = vmul.f32 1.0, %v132
  %vm134 = vcmask 122880
  %135 = vst.msk [vmem:[%s3] sm:$0x1] %vm134, %v133
  // Predicated region
  $region14: #{halting_unit.1} parent=0 // pred_check
    _
  $region15: #{halting_unit.1} parent=0 // pred_check_branch
    %137 = sbr.rel (0) target = $region17
  $region16: #{halting_unit.1} parent=0 // pred_region
    _
  $region17: #{halting_unit.1} parent=0 // pred_fallthru
    _
  // Predicated region
  $region18: #{halting_unit.1} parent=0 // pred_check
    _
  $region19: #{halting_unit.1} parent=0 // pred_check_branch
    %139 = sbr.rel (0) target = $region21
  $region20: #{halting_unit.1} parent=0 // pred_region
    _
  $region21: #{halting_unit.1} parent=0 // pred_fallthru
    _

</llo_original>
